<compile_context>
chip_gen: v6e
topology: v6e:2x2x1
jax: 0.10.0
libtpu: 0.0.40
codegen_flags: <defaults>
</compile_context>

<pallas_src>
import functools

import jax
import jax.numpy as jnp
from jax.experimental import pallas as pl
from jax.experimental.pallas import tpu as pltpu

_LANE = 128        # TPU lane width: pad feature dims to this for lane-dense stores
_SUBLANE = 16      # bf16 sublane packing: pad node-row dims to a multiple of this
_MAX_ROW_TILE = 256


def _round_up(x, m):
    return (x + m - 1) // m * m


def _pad2d(a, rows, cols, dtype):
    a = a.astype(dtype)
    return jnp.pad(a, ((0, rows - a.shape[0]), (0, cols - a.shape[1])))


def _sage_kernel(a_ref, x_ref, w1s_ref, w1n_ref, b1_ref,
                 w2s_ref, w2n_ref, b2_ref, o_ref, h1_ref, *, tm):
    """Two-phase fused SAGE: phase 0 -> h1 (scratch), phase 1 -> output."""
    phase = pl.program_id(0)
    i = pl.program_id(1)
    row0 = pl.multiple_of(i * tm, tm)

    a = a_ref[...]                      # [tm, Np] bf16 row slab of A_mean

    @pl.when(phase == 0)
    def _layer1():
        x_tile = x_ref[pl.ds(row0, tm), :]                                   # [tm, Fp]
        agg = jnp.dot(a, x_ref[...], preferred_element_type=jnp.float32)     # [tm, Fp]
        z = (jnp.dot(x_tile, w1s_ref[...], preferred_element_type=jnp.float32)
             + jnp.dot(agg.astype(jnp.bfloat16), w1n_ref[...],
                       preferred_element_type=jnp.float32)
             + b1_ref[...])                                                   # [tm, Hp]
        h1_ref[pl.ds(row0, tm), :] = jnp.maximum(z, 0.0).astype(jnp.bfloat16)
        # Deterministic filler for the output tile in phase 0; phase 1 overwrites it.
        o_ref[...] = jnp.zeros_like(o_ref)

    @pl.when(phase == 1)
    def _layer2():
        h_tile = h1_ref[pl.ds(row0, tm), :]                                  # [tm, Hp]
        agg = jnp.dot(a, h1_ref[...], preferred_element_type=jnp.float32)    # [tm, Hp]
        z = (jnp.dot(h_tile, w2s_ref[...], preferred_element_type=jnp.float32)
             + jnp.dot(agg.astype(jnp.bfloat16), w2n_ref[...],
                       preferred_element_type=jnp.float32)
             + b2_ref[...])                                                   # [tm, Op]
        o_ref[...] = z.astype(o_ref.dtype)


def sage_forward(a_mean, x, params):
    """SAGE.forward: conv1 -> relu -> conv2, fused into one pallas_call."""
    n, in_f = x.shape
    hid = params["w_self1"].shape[1]
    out_f = params["w_self2"].shape[1]

    n_p = _round_up(n, _SUBLANE)
    tm = min(n_p, _MAX_ROW_TILE)          # row tile of A / output
    n_p = _round_up(n_p, tm)              # make the grid evenly divisible
    f_p = _round_up(in_f, _LANE)
    h_p = _round_up(hid, _LANE)
    o_p = _round_up(out_f, _LANE)
    r = n_p // tm

    # Padded bf16 MXU inputs (zero padding keeps the math exact for real rows/cols:
    # padded A rows/cols are zero, so padded nodes never contribute to real nodes).
    a_p = _pad2d(a_mean, n_p, n_p, jnp.bfloat16)
    x_p = _pad2d(x, n_p, f_p, jnp.bfloat16)
    w1s = _pad2d(params["w_self1"], f_p, h_p, jnp.bfloat16)
    w1n = _pad2d(params["w_neigh1"], f_p, h_p, jnp.bfloat16)
    w2s = _pad2d(params["w_self2"], h_p, o_p, jnp.bfloat16)
    w2n = _pad2d(params["w_neigh2"], h_p, o_p, jnp.bfloat16)
    b1 = _pad2d(params["b1"], 1, h_p, jnp.float32)
    b2 = _pad2d(params["b2"], 1, o_p, jnp.float32)

    # Resident (block index constant across the grid -> fetched once, kept in VMEM).
    def resident(shape):
        return pl.BlockSpec(shape, lambda p, i: (0,) * len(shape))

    out_p = pl.pallas_call(
        functools.partial(_sage_kernel, tm=tm),
        out_shape=jax.ShapeDtypeStruct((n_p, o_p), jnp.float32),
        grid_spec=pltpu.PrefetchScalarGridSpec(
            num_scalar_prefetch=0,
            grid=(2, r),                                        # (phase, row tile)
            in_specs=[
                pl.BlockSpec((tm, n_p), lambda p, i: (i, 0)),   # A row slab, streamed
                resident((n_p, f_p)),                           # x (full, resident)
                resident((f_p, h_p)),                           # W_self1
                resident((f_p, h_p)),                           # W_neigh1
                resident((1, h_p)),                             # b1
                resident((h_p, o_p)),                           # W_self2
                resident((h_p, o_p)),                           # W_neigh2
                resident((1, o_p)),                             # b2
            ],
            out_specs=pl.BlockSpec((tm, o_p), lambda p, i: (i, 0)),
            scratch_shapes=[pltpu.VMEM((n_p, h_p), jnp.bfloat16)],   # h1, persistent
        ),
        compiler_params=pltpu.CompilerParams(
            # Phase 1 depends on h1 written by ALL phase-0 iterations -> sequential.
            dimension_semantics=("arbitrary", "arbitrary"),
            vmem_limit_bytes=32 * 1024 * 1024,
        ),
    )(a_p, x_p, w1s, w1n, b1, w2s, w2n, b2)

    return out_p[:n, :out_f]


def init_params(key, in_feats, hid_feats, out_feats):
    """Deterministic xavier-uniform-ish init (DGL uses xavier_uniform_)."""
    def xavier(k, fan_in, fan_out):
        limit = jnp.sqrt(6.0 / (fan_in + fan_out))
        return jax.random.uniform(k, (fan_in, fan_out), jnp.float32, -limit, limit)

    ks = jax.random.split(key, 4)
    return {
        "w_self1": xavier(ks[0], in_feats, hid_feats),
        "w_neigh1": xavier(ks[1], in_feats, hid_feats),
        "b1": jnp.zeros((1, hid_feats), jnp.float32),
        "w_self2": xavier(ks[2], hid_feats, out_feats),
        "w_neigh2": xavier(ks[3], hid_feats, out_feats),
        "b2": jnp.zeros((1, out_feats), jnp.float32),
    }


def build_mean_adjacency(key, n_nodes, edge_prob=0.15):
    """Dense row-normalized adjacency: A_mean[v,u] = 1/in_deg(v) if edge u->v."""
    adj = (jax.random.uniform(key, (n_nodes, n_nodes)) < edge_prob).astype(jnp.float32)
    adj = adj * (1.0 - jnp.eye(n_nodes, dtype=jnp.float32))  # no self loops
    in_deg = jnp.sum(adj, axis=1, keepdims=True)
    # nodes with zero in-degree get zero aggregation (DGL mean reducer behavior)
    return adj / jnp.maximum(in_deg, 1.0)


if __name__ == "__main__":
    key = jax.random.PRNGKey(0)
    k_graph, k_feat, k_param = jax.random.split(key, 3)

    n_nodes, in_feats, hid_feats, out_feats = 64, 16, 32, 8

    a_mean = build_mean_adjacency(k_graph, n_nodes)
    x = jax.random.normal(k_feat, (n_nodes, in_feats), jnp.float32)
    params = init_params(k_param, in_feats, hid_feats, out_feats)

    out = jax.block_until_ready(sage_forward(a_mean, x, params))

    # Pure-JAX f32 reference of the same SAGE semantics. The kernel uses bf16 MXU
    # inputs (f32 accumulation), so tolerance is loosened accordingly.
    def ref_layer(a, h, ws, wn, b, relu):
        r = h @ ws + (a @ h) @ wn + b
        return jnp.maximum(r, 0.0) if relu else r

    ref = ref_layer(a_mean, x, params["w_self1"], params["w_neigh1"], params["b1"], True)
    ref = ref_layer(a_mean, ref, params["w_self2"], params["w_neigh2"], params["b2"], False)

    assert out.shape == (n_nodes, out_feats)
    max_err = float(jnp.max(jnp.abs(out - ref)))
    assert jnp.allclose(out, ref, atol=5e-2, rtol=5e-2), max_err

    print("KERNEL_OK")
</pallas_src>

<mosaic_0001>
module attributes {stable_mosaic.version = 11 : i64} {
  func.func @_sage_kernel(%arg0: i32, %arg1: i32, %arg2: memref<64x64xbf16, #tpu.memory_space<vmem>>, %arg3: memref<64x128xbf16, #tpu.memory_space<vmem>>, %arg4: memref<128x128xbf16, #tpu.memory_space<vmem>>, %arg5: memref<128x128xbf16, #tpu.memory_space<vmem>>, %arg6: memref<1x128xf32, #tpu.memory_space<vmem>>, %arg7: memref<128x128xbf16, #tpu.memory_space<vmem>>, %arg8: memref<128x128xbf16, #tpu.memory_space<vmem>>, %arg9: memref<1x128xf32, #tpu.memory_space<vmem>>, %arg10: memref<64x128xf32, #tpu.memory_space<vmem>>, %arg11: memref<64x128xbf16, #tpu.memory_space<vmem>>) attributes {dimension_semantics = [#tpu.dimension_semantics<arbitrary>, #tpu.dimension_semantics<arbitrary>], iteration_bounds = array<i64: 2, 1>, scalar_prefetch = 0 : i64, scratch_operands = 1 : i64, tpu.core_type = #tpu.core_type<tc>, window_params = [{transform_indices = @transform_0, window_bounds = array<i64: 64, 64>}, {pipeline_mode = #tpu.pipeline_mode<synchronous>, transform_indices = @transform_1, window_bounds = array<i64: 64, 128>}, {pipeline_mode = #tpu.pipeline_mode<synchronous>, transform_indices = @transform_2, window_bounds = array<i64: 128, 128>}, {pipeline_mode = #tpu.pipeline_mode<synchronous>, transform_indices = @transform_3, window_bounds = array<i64: 128, 128>}, {pipeline_mode = #tpu.pipeline_mode<synchronous>, transform_indices = @transform_4, window_bounds = array<i64: 1, 128>}, {pipeline_mode = #tpu.pipeline_mode<synchronous>, transform_indices = @transform_5, window_bounds = array<i64: 128, 128>}, {pipeline_mode = #tpu.pipeline_mode<synchronous>, transform_indices = @transform_6, window_bounds = array<i64: 128, 128>}, {pipeline_mode = #tpu.pipeline_mode<synchronous>, transform_indices = @transform_7, window_bounds = array<i64: 1, 128>}, {transform_indices = @transform_8, window_bounds = array<i64: 64, 128>}]} {
    %c64_i32 = arith.constant 64 : i32
    %0 = arith.muli %arg1, %c64_i32 : i32
    %1 = tpu.assume_multiple %0, 64 : i32
    %c0 = arith.constant 0 : index
    %c0_0 = arith.constant 0 : index
    %2 = vector.load %arg2[%c0, %c0_0] : memref<64x64xbf16, #tpu.memory_space<vmem>>, vector<64x64xbf16>
    %c0_i32 = arith.constant 0 : i32
    %3 = arith.cmpi eq, %arg0, %c0_i32 : i32
    %4 = arith.extui %3 : i1 to i32
    %c0_i32_1 = arith.constant 0 : i32
    %5 = arith.cmpi ne, %4, %c0_i32_1 : i32
    scf.if %5 {
      %9 = arith.index_cast %1 : i32 to index
      %c0_3 = arith.constant 0 : index
      %10 = vector.load %arg3[%9, %c0_3] : memref<64x128xbf16, #tpu.memory_space<vmem>>, vector<64x128xbf16>
      %c0_4 = arith.constant 0 : index
      %c0_5 = arith.constant 0 : index
      %11 = vector.load %arg3[%c0_4, %c0_5] : memref<64x128xbf16, #tpu.memory_space<vmem>>, vector<64x128xbf16>
      %cst = arith.constant dense<0.000000e+00> : vector<64x128xf32>
      %12 = tpu.matmul %2, %11, %cst {dimension_numbers = #tpu.dot_dimension_numbers<[1], [0], [0], [1], [0, 0, 1, 1], [], []>} : vector<64x64xbf16>, vector<64x128xbf16>, vector<64x128xf32> -> vector<64x128xf32>
      %c0_6 = arith.constant 0 : index
      %c0_7 = arith.constant 0 : index
      %13 = vector.load %arg4[%c0_6, %c0_7] : memref<128x128xbf16, #tpu.memory_space<vmem>>, vector<128x128xbf16>
      %cst_8 = arith.constant dense<0.000000e+00> : vector<64x128xf32>
      %14 = tpu.matmul %10, %13, %cst_8 {dimension_numbers = #tpu.dot_dimension_numbers<[1], [0], [0], [1], [0, 0, 1, 1], [], []>} : vector<64x128xbf16>, vector<128x128xbf16>, vector<64x128xf32> -> vector<64x128xf32>
      %15 = arith.truncf %12 : vector<64x128xf32> to vector<64x128xbf16>
      %c0_9 = arith.constant 0 : index
      %c0_10 = arith.constant 0 : index
      %16 = vector.load %arg5[%c0_9, %c0_10] : memref<128x128xbf16, #tpu.memory_space<vmem>>, vector<128x128xbf16>
      %cst_11 = arith.constant dense<0.000000e+00> : vector<64x128xf32>
      %17 = tpu.matmul %15, %16, %cst_11 {dimension_numbers = #tpu.dot_dimension_numbers<[1], [0], [0], [1], [0, 0, 1, 1], [], []>} : vector<64x128xbf16>, vector<128x128xbf16>, vector<64x128xf32> -> vector<64x128xf32>
      %18 = arith.addf %14, %17 : vector<64x128xf32>
      %c0_12 = arith.constant 0 : index
      %c0_13 = arith.constant 0 : index
      %19 = vector.load %arg6[%c0_12, %c0_13] : memref<1x128xf32, #tpu.memory_space<vmem>>, vector<1x128xf32>
      %20 = vector.broadcast %19 : vector<1x128xf32> to vector<64x128xf32>
      %21 = arith.addf %18, %20 : vector<64x128xf32>
      %cst_14 = arith.constant 0.000000e+00 : f32
      %22 = vector.broadcast %cst_14 : f32 to vector<64x128xf32>
      %23 = arith.maximumf %21, %22 : vector<64x128xf32>
      %24 = arith.truncf %23 : vector<64x128xf32> to vector<64x128xbf16>
      %25 = arith.index_cast %1 : i32 to index
      %c0_15 = arith.constant 0 : index
      %26 = vector.load %arg11[%25, %c0_15] : memref<64x128xbf16, #tpu.memory_space<vmem>>, vector<64x128xbf16>
      tpu.vector_store %arg11[%25, %c0_15], %24 {strides = array<i32>} : memref<64x128xbf16, #tpu.memory_space<vmem>>, vector<64x128xbf16>,
      %cst_16 = arith.constant 0.000000e+00 : f32
      %27 = vector.broadcast %cst_16 : f32 to vector<64x128xf32>
      %c0_17 = arith.constant 0 : index
      %c0_18 = arith.constant 0 : index
      %28 = vector.load %arg10[%c0_17, %c0_18] : memref<64x128xf32, #tpu.memory_space<vmem>>, vector<64x128xf32>
      tpu.vector_store %arg10[%c0_17, %c0_18], %27 {strides = array<i32>} : memref<64x128xf32, #tpu.memory_space<vmem>>, vector<64x128xf32>,
    } else {
    }
    %c1_i32 = arith.constant 1 : i32
    %6 = arith.cmpi eq, %arg0, %c1_i32 : i32
    %7 = arith.extui %6 : i1 to i32
    %c0_i32_2 = arith.constant 0 : i32
    %8 = arith.cmpi ne, %7, %c0_i32_2 : i32
    scf.if %8 {
      %9 = arith.index_cast %1 : i32 to index
      %c0_3 = arith.constant 0 : index
      %10 = vector.load %arg11[%9, %c0_3] : memref<64x128xbf16, #tpu.memory_space<vmem>>, vector<64x128xbf16>
      %c0_4 = arith.constant 0 : index
      %c0_5 = arith.constant 0 : index
      %11 = vector.load %arg11[%c0_4, %c0_5] : memref<64x128xbf16, #tpu.memory_space<vmem>>, vector<64x128xbf16>
      %cst = arith.constant dense<0.000000e+00> : vector<64x128xf32>
      %12 = tpu.matmul %2, %11, %cst {dimension_numbers = #tpu.dot_dimension_numbers<[1], [0], [0], [1], [0, 0, 1, 1], [], []>} : vector<64x64xbf16>, vector<64x128xbf16>, vector<64x128xf32> -> vector<64x128xf32>
      %c0_6 = arith.constant 0 : index
      %c0_7 = arith.constant 0 : index
      %13 = vector.load %arg7[%c0_6, %c0_7] : memref<128x128xbf16, #tpu.memory_space<vmem>>, vector<128x128xbf16>
      %cst_8 = arith.constant dense<0.000000e+00> : vector<64x128xf32>
      %14 = tpu.matmul %10, %13, %cst_8 {dimension_numbers = #tpu.dot_dimension_numbers<[1], [0], [0], [1], [0, 0, 1, 1], [], []>} : vector<64x128xbf16>, vector<128x128xbf16>, vector<64x128xf32> -> vector<64x128xf32>
      %15 = arith.truncf %12 : vector<64x128xf32> to vector<64x128xbf16>
      %c0_9 = arith.constant 0 : index
      %c0_10 = arith.constant 0 : index
      %16 = vector.load %arg8[%c0_9, %c0_10] : memref<128x128xbf16, #tpu.memory_space<vmem>>, vector<128x128xbf16>
      %cst_11 = arith.constant dense<0.000000e+00> : vector<64x128xf32>
      %17 = tpu.matmul %15, %16, %cst_11 {dimension_numbers = #tpu.dot_dimension_numbers<[1], [0], [0], [1], [0, 0, 1, 1], [], []>} : vector<64x128xbf16>, vector<128x128xbf16>, vector<64x128xf32> -> vector<64x128xf32>
      %18 = arith.addf %14, %17 : vector<64x128xf32>
      %c0_12 = arith.constant 0 : index
      %c0_13 = arith.constant 0 : index
      %19 = vector.load %arg9[%c0_12, %c0_13] : memref<1x128xf32, #tpu.memory_space<vmem>>, vector<1x128xf32>
      %20 = vector.broadcast %19 : vector<1x128xf32> to vector<64x128xf32>
      %21 = arith.addf %18, %20 : vector<64x128xf32>
      %c0_14 = arith.constant 0 : index
      %c0_15 = arith.constant 0 : index
      %22 = vector.load %arg10[%c0_14, %c0_15] : memref<64x128xf32, #tpu.memory_space<vmem>>, vector<64x128xf32>
      tpu.vector_store %arg10[%c0_14, %c0_15], %21 {strides = array<i32>} : memref<64x128xf32, #tpu.memory_space<vmem>>, vector<64x128xf32>,
    } else {
    }
    return
  }
  func.func @transform_0(%arg0: i32, %arg1: i32) -> (i32, i32) {
    %c0_i32 = arith.constant 0 : i32
    %c0_i32_0 = arith.constant 0 : i32
    return %arg1, %c0_i32 : i32, i32
  }
  func.func @transform_1(%arg0: i32, %arg1: i32) -> (i32, i32) {
    %c0_i32 = arith.constant 0 : i32
    %c0_i32_0 = arith.constant 0 : i32
    %c0_i32_1 = arith.constant 0 : i32
    return %c0_i32, %c0_i32_0 : i32, i32
  }
  func.func @transform_2(%arg0: i32, %arg1: i32) -> (i32, i32) {
    %c0_i32 = arith.constant 0 : i32
    %c0_i32_0 = arith.constant 0 : i32
    %c0_i32_1 = arith.constant 0 : i32
    return %c0_i32, %c0_i32_0 : i32, i32
  }
  func.func @transform_3(%arg0: i32, %arg1: i32) -> (i32, i32) {
    %c0_i32 = arith.constant 0 : i32
    %c0_i32_0 = arith.constant 0 : i32
    %c0_i32_1 = arith.constant 0 : i32
    return %c0_i32, %c0_i32_0 : i32, i32
  }
  func.func @transform_4(%arg0: i32, %arg1: i32) -> (i32, i32) {
    %c0_i32 = arith.constant 0 : i32
    %c0_i32_0 = arith.constant 0 : i32
    %c0_i32_1 = arith.constant 0 : i32
    return %c0_i32, %c0_i32_0 : i32, i32
  }
  func.func @transform_5(%arg0: i32, %arg1: i32) -> (i32, i32) {
    %c0_i32 = arith.constant 0 : i32
    %c0_i32_0 = arith.constant 0 : i32
    %c0_i32_1 = arith.constant 0 : i32
    return %c0_i32, %c0_i32_0 : i32, i32
  }
  func.func @transform_6(%arg0: i32, %arg1: i32) -> (i32, i32) {
    %c0_i32 = arith.constant 0 : i32
    %c0_i32_0 = arith.constant 0 : i32
    %c0_i32_1 = arith.constant 0 : i32
    return %c0_i32, %c0_i32_0 : i32, i32
  }
  func.func @transform_7(%arg0: i32, %arg1: i32) -> (i32, i32) {
    %c0_i32 = arith.constant 0 : i32
    %c0_i32_0 = arith.constant 0 : i32
    %c0_i32_1 = arith.constant 0 : i32
    return %c0_i32, %c0_i32_0 : i32, i32
  }
  func.func @transform_8(%arg0: i32, %arg1: i32) -> (i32, i32) {
    %c0_i32 = arith.constant 0 : i32
    %c0_i32_0 = arith.constant 0 : i32
    return %arg1, %c0_i32 : i32, i32
  }
}

</mosaic_0001>

<llo_original>
// kernel: tpu_custom_call.1
$region0: #{tpu_custom_call.1}
  #allocation0 [shape = 'u32[]', space=smem, size = 0x4, offset = 0x4, fixed_abs, tag = 'smem constant byte address 0x4 - core index']
  #allocation1 [shape = 'u32[144,128]{1,0:T(1,128)}', space=vmem, size = 0x12000, scoped, tag = 'internal scratch']
  #allocation2 [shape = 'bf16[64,128]{1,0:T(8,128)(2,1)}', space=vmem, size = 0x4000, scoped, tag = 'scratch operand']
  %s0 = inlined_call_operand.hbm [shape: bf16[64,64], index: 0, kind: input, shape index: {}]
  %s1 = inlined_call_operand.hbm [shape: bf16[64,128], index: 1, kind: input, shape index: {}]
  %s2 = inlined_call_operand.hbm [shape: bf16[128,128], index: 2, kind: input, shape index: {}]
  %s3 = inlined_call_operand.hbm [shape: bf16[128,128], index: 3, kind: input, shape index: {}]
  %s4 = inlined_call_operand.vmem [shape: f32[1,128], index: 4, kind: input, shape index: {}]
  %s5 = inlined_call_operand.hbm [shape: bf16[128,128], index: 5, kind: input, shape index: {}]
  %s6 = inlined_call_operand.hbm [shape: bf16[128,128], index: 6, kind: input, shape index: {}]
  %s7 = inlined_call_operand.vmem [shape: f32[1,128], index: 7, kind: input, shape index: {}]
  %s8 = inlined_call_operand.hbm [shape: f32[64,128], index: 8, kind: output, shape index: {}]
  %s9 = sld [smem:[#allocation0]]
  $region97: #{tpu_custom_call.1} parent=0
    _
  %s11 = ssub.s32 1, %s9
  %s12 = scalar_select 0, %s11, %s9
  $region1: #{tpu_custom_call.1} parent=0
    #allocation3 [shape = 'u8[16384]{0}', space=vmem, size = 0x4000, scoped, tag = 'input window, operand 0, single buffered']
    #allocation4 [shape = 's32[2]{0}', space=sflag, size = 0x8, scoped, tag = 'scoped memory for tpu_custom_call.1']
    #allocation5 [shape = 's32[2]{0}', space=sflag, size = 0x8, scoped, tag = 'scoped memory for tpu_custom_call.1']
    #allocation6 [shape = 'u8[16384]{0}', space=vmem, size = 0x4000, scoped, tag = 'input window, operand 1, single buffered']
    #allocation7 [shape = 's32[1]{0}', space=sflag, size = 0x4, scoped, tag = 'scoped memory for tpu_custom_call.1']
    #allocation8 [shape = 'u8[32768]{0}', space=vmem, size = 0x8000, scoped, tag = 'input window, operand 2, single buffered']
    #allocation9 [shape = 'u8[32768]{0}', space=vmem, size = 0x8000, scoped, tag = 'input window, operand 3, single buffered']
    #allocation10 [shape = 's32[1]{0}', space=sflag, size = 0x4, scoped, tag = 'scoped memory for tpu_custom_call.1']
    #allocation11 [shape = 'u8[32768]{0}', space=vmem, size = 0x8000, scoped, tag = 'input window, operand 5, single buffered']
    #allocation12 [shape = 'u8[32768]{0}', space=vmem, size = 0x8000, scoped, tag = 'input window, operand 6, single buffered']
    #allocation13 [shape = 's32[1]{0}', space=sflag, size = 0x4, scoped, tag = 'scoped memory for tpu_custom_call.1']
    #allocation14 [shape = 'u8[32768]{0}', space=vmem, size = 0x8000, scoped, tag = 'output window, operand 0, single buffered']
    %13 = vsyncpa [#allocation4], 0
    %14 = vsyncpa [#allocation7], 0
    %15 = vsyncpa [#allocation10], 0
    %16 = vsyncpa [#allocation13], 0
    %17 = vsyncpa [#allocation5], 0
    loop: start=0, step=1, limit=4
    $region2: #{tpu_custom_call.1} parent=1 // loop_pre_header
      _
    $region3: #{tpu_custom_call.1} parent=1 // loop_header
      %s19 = sphi 0, %s23
      %p20 = scmp.ge.s32.totalorder %s19, 4
      %s26 = sphi 0, %s38
      %s27 = sphi 0, %s34
      %s28 = sphi 0, %s26
      %s29 = sphi 0, %s27
      %s30 = sphi 0, %s28
      %s31 = sphi 0, %s29
      %s41 = sphi 0, %s43
      %s44 = sphi 0, %s41
      %s45 = sphi 0, %s44
      %s61 = sphi 0, %s45
      %s65 = sphi 0, %s65
      %s67 = sphi 0, %s65
      %s68 = sphi 0, %s67
      %s82 = sphi 0, %s68
      %s86 = sphi 0, %s86
      %s88 = sphi 0, %s86
      %s89 = sphi 0, %s88
      %s103 = sphi 0, %s89
      %s107 = sphi 0, %s107
      %s109 = sphi 0, %s107
      %s110 = sphi 0, %s109
      %s124 = sphi 0, %s110
      %s128 = sphi 0, %s128
      %s130 = sphi 0, %s128
      %s131 = sphi 0, %s130
      %s145 = sphi 0, %s131
      %s149 = sphi 0, %s149
      %s151 = sphi 0, %s149
      %s152 = sphi 0, %s151
      %s166 = sphi 0, %s152
      %s170 = sphi 0, %s170
      %s172 = sphi 0, %s170
      %s173 = sphi 0, %s172
      %s187 = sphi 0, %s173
      %s191 = sphi 0, %s191
      %s193 = sphi 0, %s191
      %s194 = sphi 0, %s193
      %s208 = sphi 0, %s194
      %s214 = sphi 0, %s216
      %s217 = sphi 0, %s214
      %s218 = sphi 0, %s217
      %s234 = sphi 0, %s218
    $region4: #{tpu_custom_call.1} parent=1 // loop_header_branch
      %22 = sbr.rel (%p20) target = $region8
    $region5: #{tpu_custom_call.1} parent=1 // loop_body
      %s24 = ssub.s32 %s19, 1
      %s25 = ssub.s32 %s19, 2
      %s32 = sadd.s32 1, %s27
      %p33 = scmp.ge.s32.totalorder %s32, 1
      %s34 = scalar_select %p33, 0, %s32
      %s35 = sadd.s32 1, %s26
      %s36 = scalar_select %p33, %s35, %s26
      %p37 = scmp.ge.s32.totalorder %s36, 2
      %s38 = scalar_select %p37, 0, %s36
      %s39 = ssub.s32 %s27, %s34
      %p40 = scmp.eq.s32.totalorder %s39, 0
      %s42 = sadd.s32 %s41, 1
      %s43 = scalar_select %p40, %s41, %s42
      %p46 = pneg %p40
      %p47 = scmp.eq.s32.totalorder %s19, 1
      %p48 = por %p46, %p47
      %p49 = scmp.ne.s32.totalorder %s41, %s44
      %p50 = scmp.eq.s32.totalorder %s19, 0
      %p51 = por %p49, %p50
      %p52 = scmp.ne.s32.totalorder %s41, %s44
      %p53 = scmp.eq.s32.totalorder %s24, 1
      %p54 = por %p52, %p53
      %p55 = scmp.ne.s32.totalorder %s44, %s45
      %p56 = scmp.eq.s32.totalorder %s24, 0
      %p57 = por %p55, %p56
      %p58 = scmp.ne.s32.totalorder %s44, %s45
      %p59 = scmp.eq.s32.totalorder %s25, 1
      %p60 = por %p58, %p59
      %p62 = scmp.ne.s32.totalorder %s45, %s61
      %p63 = scmp.eq.s32.totalorder %s25, 0
      %p64 = por %p62, %p63
      %s66 = sadd.s32 %s65, 1
      %p69 = scmp.eq.s32.totalorder %s19, 1
      %p70 = scmp.ne.s32.totalorder %s65, %s67
      %p71 = scmp.eq.s32.totalorder %s19, 0
      %p72 = por %p70, %p71
      %p73 = scmp.ne.s32.totalorder %s65, %s67
      %p74 = scmp.eq.s32.totalorder %s24, 1
      %p75 = por %p73, %p74
      %p76 = scmp.ne.s32.totalorder %s67, %s68
      %p77 = scmp.eq.s32.totalorder %s24, 0
      %p78 = por %p76, %p77
      %p79 = scmp.ne.s32.totalorder %s67, %s68
      %p80 = scmp.eq.s32.totalorder %s25, 1
      %p81 = por %p79, %p80
      %p83 = scmp.ne.s32.totalorder %s68, %s82
      %p84 = scmp.eq.s32.totalorder %s25, 0
      %p85 = por %p83, %p84
      %s87 = sadd.s32 %s86, 1
      %p90 = scmp.eq.s32.totalorder %s19, 1
      %p91 = scmp.ne.s32.totalorder %s86, %s88
      %p92 = scmp.eq.s32.totalorder %s19, 0
      %p93 = por %p91, %p92
      %p94 = scmp.ne.s32.totalorder %s86, %s88
      %p95 = scmp.eq.s32.totalorder %s24, 1
      %p96 = por %p94, %p95
      %p97 = scmp.ne.s32.totalorder %s88, %s89
      %p98 = scmp.eq.s32.totalorder %s24, 0
      %p99 = por %p97, %p98
      %p100 = scmp.ne.s32.totalorder %s88, %s89
      %p101 = scmp.eq.s32.totalorder %s25, 1
      %p102 = por %p100, %p101
      %p104 = scmp.ne.s32.totalorder %s89, %s103
      %p105 = scmp.eq.s32.totalorder %s25, 0
      %p106 = por %p104, %p105
      %s108 = sadd.s32 %s107, 1
      %p111 = scmp.eq.s32.totalorder %s19, 1
      %p112 = scmp.ne.s32.totalorder %s107, %s109
      %p113 = scmp.eq.s32.totalorder %s19, 0
      %p114 = por %p112, %p113
      %p115 = scmp.ne.s32.totalorder %s107, %s109
      %p116 = scmp.eq.s32.totalorder %s24, 1
      %p117 = por %p115, %p116
      %p118 = scmp.ne.s32.totalorder %s109, %s110
      %p119 = scmp.eq.s32.totalorder %s24, 0
      %p120 = por %p118, %p119
      %p121 = scmp.ne.s32.totalorder %s109, %s110
      %p122 = scmp.eq.s32.totalorder %s25, 1
      %p123 = por %p121, %p122
      %p125 = scmp.ne.s32.totalorder %s110, %s124
      %p126 = scmp.eq.s32.totalorder %s25, 0
      %p127 = por %p125, %p126
      %s129 = sadd.s32 %s128, 1
      %p132 = scmp.eq.s32.totalorder %s19, 1
      %p133 = scmp.ne.s32.totalorder %s128, %s130
      %p134 = scmp.eq.s32.totalorder %s19, 0
      %p135 = por %p133, %p134
      %p136 = scmp.ne.s32.totalorder %s128, %s130
      %p137 = scmp.eq.s32.totalorder %s24, 1
      %p138 = por %p136, %p137
      %p139 = scmp.ne.s32.totalorder %s130, %s131
      %p140 = scmp.eq.s32.totalorder %s24, 0
      %p141 = por %p139, %p140
      %p142 = scmp.ne.s32.totalorder %s130, %s131
      %p143 = scmp.eq.s32.totalorder %s25, 1
      %p144 = por %p142, %p143
      %p146 = scmp.ne.s32.totalorder %s131, %s145
      %p147 = scmp.eq.s32.totalorder %s25, 0
      %p148 = por %p146, %p147
      %s150 = sadd.s32 %s149, 1
      %p153 = scmp.eq.s32.totalorder %s19, 1
      %p154 = scmp.ne.s32.totalorder %s149, %s151
      %p155 = scmp.eq.s32.totalorder %s19, 0
      %p156 = por %p154, %p155
      %p157 = scmp.ne.s32.totalorder %s149, %s151
      %p158 = scmp.eq.s32.totalorder %s24, 1
      %p159 = por %p157, %p158
      %p160 = scmp.ne.s32.totalorder %s151, %s152
      %p161 = scmp.eq.s32.totalorder %s24, 0
      %p162 = por %p160, %p161
      %p163 = scmp.ne.s32.totalorder %s151, %s152
      %p164 = scmp.eq.s32.totalorder %s25, 1
      %p165 = por %p163, %p164
      %p167 = scmp.ne.s32.totalorder %s152, %s166
      %p168 = scmp.eq.s32.totalorder %s25, 0
      %p169 = por %p167, %p168
      %s171 = sadd.s32 %s170, 1
      %p174 = scmp.eq.s32.totalorder %s19, 1
      %p175 = scmp.ne.s32.totalorder %s170, %s172
      %p176 = scmp.eq.s32.totalorder %s19, 0
      %p177 = por %p175, %p176
      %p178 = scmp.ne.s32.totalorder %s170, %s172
      %p179 = scmp.eq.s32.totalorder %s24, 1
      %p180 = por %p178, %p179
      %p181 = scmp.ne.s32.totalorder %s172, %s173
      %p182 = scmp.eq.s32.totalorder %s24, 0
      %p183 = por %p181, %p182
      %p184 = scmp.ne.s32.totalorder %s172, %s173
      %p185 = scmp.eq.s32.totalorder %s25, 1
      %p186 = por %p184, %p185
      %p188 = scmp.ne.s32.totalorder %s173, %s187
      %p189 = scmp.eq.s32.totalorder %s25, 0
      %p190 = por %p188, %p189
      %s192 = sadd.s32 %s191, 1
      %p195 = scmp.eq.s32.totalorder %s19, 1
      %p196 = scmp.ne.s32.totalorder %s191, %s193
      %p197 = scmp.eq.s32.totalorder %s19, 0
      %p198 = por %p196, %p197
      %p199 = scmp.ne.s32.totalorder %s191, %s193
      %p200 = scmp.eq.s32.totalorder %s24, 1
      %p201 = por %p199, %p200
      %p202 = scmp.ne.s32.totalorder %s193, %s194
      %p203 = scmp.eq.s32.totalorder %s24, 0
      %p204 = por %p202, %p203
      %p205 = scmp.ne.s32.totalorder %s193, %s194
      %p206 = scmp.eq.s32.totalorder %s25, 1
      %p207 = por %p205, %p206
      %p209 = scmp.ne.s32.totalorder %s194, %s208
      %p210 = scmp.eq.s32.totalorder %s25, 0
      %p211 = por %p209, %p210
      %s212 = ssub.s32 %s27, %s34
      %p213 = scmp.eq.s32.totalorder %s212, 0
      %s215 = sadd.s32 %s214, 1
      %s216 = scalar_select %p213, %s214, %s215
      %p219 = pneg %p213
      %p220 = scmp.eq.s32.totalorder %s19, 1
      %p221 = por %p219, %p220
      %p222 = scmp.ne.s32.totalorder %s214, %s217
      %p223 = scmp.eq.s32.totalorder %s19, 0
      %p224 = por %p222, %p223
      %p225 = scmp.ne.s32.totalorder %s214, %s217
      %p226 = scmp.eq.s32.totalorder %s24, 1
      %p227 = por %p225, %p226
      %p228 = scmp.ne.s32.totalorder %s217, %s218
      %p229 = scmp.eq.s32.totalorder %s24, 0
      %p230 = por %p228, %p229
      %p231 = scmp.ne.s32.totalorder %s217, %s218
      %p232 = scmp.eq.s32.totalorder %s25, 1
      %p233 = por %p231, %p232
      %p235 = scmp.ne.s32.totalorder %s218, %s234
      %p236 = scmp.eq.s32.totalorder %s25, 0
      %p237 = por %p235, %p236
      %p238 = scmp.le.s32.totalorder 1, %s19
      %p239 = scmp.lt.s32.totalorder %s19, 3
      %p240 = pnand %p238, %p239
      %p241 = pneg %p240
      // Predicated region
      $region9: #{tpu_custom_call.1} parent=5 // pred_check
        _
      $region10: #{tpu_custom_call.1} parent=5 // pred_check_branch
        %243 = sbr.rel (%p240) target = $region12
      $region11: #{tpu_custom_call.1} parent=5 // pred_region
        %s244 = ssub.s32 %s19, 1
        // Predicated region
        $region13: #{tpu_custom_call.1} parent=11 // pred_check
          %p245 = pneg %p57
        $region14: #{tpu_custom_call.1} parent=11 // pred_check_branch
          %247 = sbr.rel (%p245) target = $region16
        $region15: #{tpu_custom_call.1} parent=11 // pred_region
          %s248 = smul.u32 8, %s29
          %s250 = ssub.s32 512, 512
          %251 = vsyncadd [#allocation4], %s250
          %s252 = smul.addr %s248, 64
          %s253 = scalar_lea.hbm %s0, %s252
          %s254 = sshll.u32 [#allocation3], 4
          %s255 = int_to_ptr.vmem [resolvable:$true] %s254
          %260 = dma.hbm_to_vmem [thread:$0]  %s253, 512, %s255, [#allocation4], 64, 64, 4
        $region16: #{tpu_custom_call.1} parent=11 // pred_fallthru
          _
        // Predicated region
        $region17: #{tpu_custom_call.1} parent=11 // pred_check
          %p261 = pneg %p78
        $region18: #{tpu_custom_call.1} parent=11 // pred_check_branch
          %263 = sbr.rel (%p261) target = $region20
        $region19: #{tpu_custom_call.1} parent=11 // pred_region
          %s265 = ssub.s32 512, 512
          %266 = vsyncadd [#allocation7], %s265
          %s267 = sshll.u32 [#allocation6], 4
          %s268 = int_to_ptr.vmem [resolvable:$true] %s267
          %273 = dma.hbm_to_vmem [thread:$0]  %s1, 512, %s268, [#allocation7], 64, 64, 4
        $region20: #{tpu_custom_call.1} parent=11 // pred_fallthru
          _
        // Predicated region
        $region21: #{tpu_custom_call.1} parent=11 // pred_check
          %p274 = pneg %p99
        $region22: #{tpu_custom_call.1} parent=11 // pred_check_branch
          %276 = sbr.rel (%p274) target = $region24
        $region23: #{tpu_custom_call.1} parent=11 // pred_region
          %s278 = ssub.s32 1024, 1024
          %279 = vsyncadd [#allocation7], %s278
          %s280 = sshll.u32 [#allocation8], 4
          %s281 = int_to_ptr.vmem [resolvable:$true] %s280
          %286 = dma.hbm_to_vmem [thread:$0]  %s2, 1024, %s281, [#allocation7], 64, 64, 4
        $region24: #{tpu_custom_call.1} parent=11 // pred_fallthru
          _
        // Predicated region
        $region25: #{tpu_custom_call.1} parent=11 // pred_check
          %p287 = pneg %p120
        $region26: #{tpu_custom_call.1} parent=11 // pred_check_branch
          %289 = sbr.rel (%p287) target = $region28
        $region27: #{tpu_custom_call.1} parent=11 // pred_region
          %s291 = ssub.s32 1024, 1024
          %292 = vsyncadd [#allocation10], %s291
          %s293 = sshll.u32 [#allocation9], 4
          %s294 = int_to_ptr.vmem [resolvable:$true] %s293
          %299 = dma.hbm_to_vmem [thread:$0]  %s3, 1024, %s294, [#allocation10], 64, 64, 4
        $region28: #{tpu_custom_call.1} parent=11 // pred_fallthru
          _
        // Predicated region
        $region29: #{tpu_custom_call.1} parent=11 // pred_check
          %p300 = pneg %p141
        $region30: #{tpu_custom_call.1} parent=11 // pred_check_branch
          %302 = sbr.rel (%p300) target = $region32
        $region31: #{tpu_custom_call.1} parent=11 // pred_region
          _
        $region32: #{tpu_custom_call.1} parent=11 // pred_fallthru
          _
        // Predicated region
        $region33: #{tpu_custom_call.1} parent=11 // pred_check
          %p303 = pneg %p162
        $region34: #{tpu_custom_call.1} parent=11 // pred_check_branch
          %305 = sbr.rel (%p303) target = $region36
        $region35: #{tpu_custom_call.1} parent=11 // pred_region
          %s307 = ssub.s32 1024, 1024
          %308 = vsyncadd [#allocation10], %s307
          %s309 = sshll.u32 [#allocation11], 4
          %s310 = int_to_ptr.vmem [resolvable:$true] %s309
          %315 = dma.hbm_to_vmem [thread:$0]  %s5, 1024, %s310, [#allocation10], 64, 64, 4
        $region36: #{tpu_custom_call.1} parent=11 // pred_fallthru
          _
        // Predicated region
        $region37: #{tpu_custom_call.1} parent=11 // pred_check
          %p316 = pneg %p183
        $region38: #{tpu_custom_call.1} parent=11 // pred_check_branch
          %318 = sbr.rel (%p316) target = $region40
        $region39: #{tpu_custom_call.1} parent=11 // pred_region
          %s320 = ssub.s32 1024, 1024
          %321 = vsyncadd [#allocation13], %s320
          %s322 = sshll.u32 [#allocation12], 4
          %s323 = int_to_ptr.vmem [resolvable:$true] %s322
          %328 = dma.hbm_to_vmem [thread:$0]  %s6, 1024, %s323, [#allocation13], 64, 64, 4
        $region40: #{tpu_custom_call.1} parent=11 // pred_fallthru
          _
        // Predicated region
        $region41: #{tpu_custom_call.1} parent=11 // pred_check
          %p329 = pneg %p204
        $region42: #{tpu_custom_call.1} parent=11 // pred_check_branch
          %331 = sbr.rel (%p329) target = $region44
        $region43: #{tpu_custom_call.1} parent=11 // pred_region
          _
        $region44: #{tpu_custom_call.1} parent=11 // pred_fallthru
          _
      $region12: #{tpu_custom_call.1} parent=5 // pred_fallthru
        _
      %p332 = scmp.lt.s32.totalorder %s19, 2
      // Predicated region
      $region45: #{tpu_custom_call.1} parent=5 // pred_check
        %p333 = pneg %p332
      $region46: #{tpu_custom_call.1} parent=5 // pred_check_branch
        %335 = sbr.rel (%p333) target = $region48
      $region47: #{tpu_custom_call.1} parent=5 // pred_region
        _
      $region48: #{tpu_custom_call.1} parent=5 // pred_fallthru
        _
      %p336 = scmp.le.s32.totalorder 1, %s19
      %p337 = scmp.lt.s32.totalorder %s19, 3
      %p338 = pnand %p336, %p337
      %p339 = pneg %p338
      // Predicated region
      $region49: #{tpu_custom_call.1} parent=5 // pred_check
        _
      $region50: #{tpu_custom_call.1} parent=5 // pred_check_branch
        %341 = sbr.rel (%p338) target = $region52
      $region51: #{tpu_custom_call.1} parent=5 // pred_region
        %s342 = ssub.s32 %s19, 1
        // Predicated region
        $region53: #{tpu_custom_call.1} parent=51 // pred_check
          %p343 = pneg %p57
        $region54: #{tpu_custom_call.1} parent=51 // pred_check_branch
          %345 = sbr.rel (%p343) target = $region56
        $region55: #{tpu_custom_call.1} parent=51 // pred_region
          %346 = dma.done [#allocation4], 512
        $region56: #{tpu_custom_call.1} parent=51 // pred_fallthru
          _
        // Predicated region
        $region57: #{tpu_custom_call.1} parent=51 // pred_check
          %p347 = pneg %p78
        $region58: #{tpu_custom_call.1} parent=51 // pred_check_branch
          %349 = sbr.rel (%p347) target = $region60
        $region59: #{tpu_custom_call.1} parent=51 // pred_region
          %350 = dma.done [#allocation7], 512
        $region60: #{tpu_custom_call.1} parent=51 // pred_fallthru
          _
        // Predicated region
        $region61: #{tpu_custom_call.1} parent=51 // pred_check
          %p351 = pneg %p99
        $region62: #{tpu_custom_call.1} parent=51 // pred_check_branch
          %353 = sbr.rel (%p351) target = $region64
        $region63: #{tpu_custom_call.1} parent=51 // pred_region
          %354 = dma.done [#allocation7], 1024
        $region64: #{tpu_custom_call.1} parent=51 // pred_fallthru
          _
        // Predicated region
        $region65: #{tpu_custom_call.1} parent=51 // pred_check
          %p355 = pneg %p120
        $region66: #{tpu_custom_call.1} parent=51 // pred_check_branch
          %357 = sbr.rel (%p355) target = $region68
        $region67: #{tpu_custom_call.1} parent=51 // pred_region
          %358 = dma.done [#allocation10], 1024
        $region68: #{tpu_custom_call.1} parent=51 // pred_fallthru
          _
        // Predicated region
        $region69: #{tpu_custom_call.1} parent=51 // pred_check
          %p359 = pneg %p162
        $region70: #{tpu_custom_call.1} parent=51 // pred_check_branch
          %361 = sbr.rel (%p359) target = $region72
        $region71: #{tpu_custom_call.1} parent=51 // pred_region
          %362 = dma.done [#allocation10], 1024
        $region72: #{tpu_custom_call.1} parent=51 // pred_fallthru
          _
        // Predicated region
        $region73: #{tpu_custom_call.1} parent=51 // pred_check
          %p363 = pneg %p183
        $region74: #{tpu_custom_call.1} parent=51 // pred_check_branch
          %365 = sbr.rel (%p363) target = $region76
        $region75: #{tpu_custom_call.1} parent=51 // pred_region
          %366 = dma.done [#allocation13], 1024
        $region76: #{tpu_custom_call.1} parent=51 // pred_fallthru
          _
        %p367 = pneg %p57
        %p368 = pneg %p54
        %p369 = pneg %p78
        %p370 = pneg %p75
        %p371 = pneg %p99
        %p372 = pneg %p96
        %p373 = pneg %p120
        %p374 = pneg %p117
        %p375 = pneg %p141
        %p376 = pneg %p138
        %p377 = pneg %p162
        %p378 = pneg %p159
        %p379 = pneg %p183
        %p380 = pneg %p180
        %p381 = pneg %p204
        %p382 = pneg %p201
        %p383 = pneg %p230
        %p384 = pneg %p227
        %s385 = smul.u32 8, %s29
        %s386 = smul.u32 8, %s29
        %s388 = smul.u32 %s29, 64
        %v389 = vld [vmem:[#allocation3] sm:$0xf]
        %v390 = vld [vmem:[#allocation3 + $0x4] sm:$0xf]
        %v391 = vld [vmem:[#allocation3 + $0x8] sm:$0xf]
        %v392 = vld [vmem:[#allocation3 + $0xc] sm:$0xf]
        %v393 = vld [vmem:[#allocation3 + $0x10] sm:$0xf]
        %v394 = vld [vmem:[#allocation3 + $0x14] sm:$0xf]
        %v395 = vld [vmem:[#allocation3 + $0x18] sm:$0xf]
        %v396 = vld [vmem:[#allocation3 + $0x1c] sm:$0xf]
        %p397 = scmp.eq.s32.totalorder %s28, 0
        // Predicated region
        $region77: #{tpu_custom_call.1} parent=51 // pred_check
          %p398 = pneg %p397
        $region78: #{tpu_custom_call.1} parent=51 // pred_check_branch
          %400 = sbr.rel (%p398) target = $region80
        $region79: #{tpu_custom_call.1} parent=51 // pred_region
          %s401 = sshra.s32 %s388, 3
          %s402 = sand.u32 %s388, 7
          %s403 = smul.addr %s401, 4
          %s404 = scalar_lea.vmem [#allocation6], %s403
          %v405 = vld [vmem:[%s404] sm:$0xf]
          %v406 = vld [vmem:[%s404 + $0x4] sm:$0xf]
          %v407 = vld [vmem:[%s404 + $0x8] sm:$0xf]
          %v408 = vld [vmem:[%s404 + $0xc] sm:$0xf]
          %v409 = vld [vmem:[%s404 + $0x10] sm:$0xf]
          %v410 = vld [vmem:[%s404 + $0x14] sm:$0xf]
          %v411 = vld [vmem:[%s404 + $0x18] sm:$0xf]
          %v412 = vld [vmem:[%s404 + $0x1c] sm:$0xf]
          %v413 = vld [vmem:[#allocation6] sm:$0xf]
          %v414 = vld [vmem:[#allocation6 + $0x4] sm:$0xf]
          %v415 = vld [vmem:[#allocation6 + $0x8] sm:$0xf]
          %v416 = vld [vmem:[#allocation6 + $0xc] sm:$0xf]
          %v417 = vld [vmem:[#allocation6 + $0x10] sm:$0xf]
          %v418 = vld [vmem:[#allocation6 + $0x14] sm:$0xf]
          %v419 = vld [vmem:[#allocation6 + $0x18] sm:$0xf]
          %v420 = vld [vmem:[#allocation6 + $0x1c] sm:$0xf]
          %v429 = vunpack.c.l.b16 %v389
          %v430 = vunpack.c.l.b16 %v390
          %v431 = vunpack.c.l.b16 %v391
          %v432 = vunpack.c.l.b16 %v392
          %v433 = vunpack.c.l.b16 %v393
          %v434 = vunpack.c.l.b16 %v394
          %v435 = vunpack.c.l.b16 %v395
          %v436 = vunpack.c.l.b16 %v396
          %v437 = vpack.c.b16 %v430, %v429
          %v438 = vpack.c.b16 %v432, %v431
          %v439 = vpack.c.b16 %v434, %v433
          %v440 = vpack.c.b16 %v436, %v435
          %v449 = vunpack.c.l.b16 %v413
          %v450 = vunpack.c.l.b16 %v414
          %v451 = vunpack.c.l.b16 %v415
          %v452 = vunpack.c.l.b16 %v416
          %v453 = vunpack.c.l.b16 %v417
          %v454 = vunpack.c.l.b16 %v418
          %v455 = vunpack.c.l.b16 %v419
          %v456 = vunpack.c.l.b16 %v420
          %v457 = vpack.c.b16 %v450, %v449
          %v458 = vpack.c.b16 %v452, %v451
          %v459 = vpack.c.b16 %v454, %v453
          %v460 = vpack.c.b16 %v456, %v455
          %vm465 = vcmask 523264
          %v467 = vsel %vm465, %v437, 0
          %v470 = vsel %vm465, %v438, 0
          %v473 = vsel %vm465, %v439, 0
          %v476 = vsel %vm465, %v440, 0
          %478 = vmatprep.subr.bf16.mxu0 0
          %479 = vmatpush1.bf16.msra.mxu0 0
          %480 = vmatprep.subr.bf16.mxu0 0
          %481 = vmatpush1.bf16.msra.mxu0 0
          %482 = vmatprep.subr.bf16.mxu0 0
          %483 = vmatpush1.bf16.msra.mxu0 0
          %484 = vmatprep.subr.bf16.mxu0 0
          %485 = vmatpush1.bf16.msra.mxu0 0
          %486 = vmatprep.subr.bf16.mxu0 0
          %487 = vmatpush1.bf16.msra.mxu0 %v460
          %488 = vmatprep.subr.bf16.mxu0 0
          %489 = vmatpush1.bf16.msra.mxu0 %v459
          %490 = vmatprep.subr.bf16.mxu0 0
          %491 = vmatpush1.bf16.msra.mxu0 %v458
          %492 = vmatprep.subr.bf16.mxu0 0
          %493 = vmatpush1.bf16.msra.mxu0 %v457
          %494 = vmatprep.subr.bf16.mxu0 0
          %495 = vmatpush2.bf16.msra.mxu0 0
          %496 = vmatprep.subr.bf16.mxu0 0
          %497 = vmatpush2.bf16.msra.mxu0 0
          %498 = vmatprep.subr.bf16.mxu0 0
          %499 = vmatpush2.bf16.msra.mxu0 0
          %500 = vmatprep.subr.bf16.mxu0 0
          %501 = vmatpush2.bf16.msra.mxu0 0
          %502 = vmatprep.subr.bf16.mxu0 0
          %503 = vmatpush2.bf16.msra.mxu0 0
          %504 = vmatprep.subr.bf16.mxu0 0
          %505 = vmatpush2.bf16.msra.mxu0 0
          %506 = vmatprep.subr.bf16.mxu0 0
          %507 = vmatpush2.bf16.msra.mxu0 0
          %508 = vmatprep.subr.bf16.mxu0 0
          %509 = vmatpush2.bf16.msra.mxu0 0
          %510 = vmatprep.mubr.bf16.mxu0 0
          %511 = vmatmul.mubr.bf16.gmra.mxu0 %v467
          %v512 = vpop.f32.mrf.mxu0
          %v513 = vadd.f32 0.0, %v512
          %v514 = vpop.f32.mrf.mxu0
          %v515 = vpop.f32.mrf.mxu0
          %v516 = vadd.f32 0.0, %v515
          %v517 = vpop.f32.mrf.mxu0
          %518 = vmatprep.mubr.bf16.mxu0 0
          %519 = vmatmul.mubr.bf16.gmra.mxu0 %v470
          %v520 = vpop.f32.mrf.mxu0
          %v521 = vadd.f32 0.0, %v520
          %v522 = vpop.f32.mrf.mxu0
          %v523 = vpop.f32.mrf.mxu0
          %v524 = vadd.f32 0.0, %v523
          %v525 = vpop.f32.mrf.mxu0
          %526 = vmatprep.mubr.bf16.mxu0 0
          %527 = vmatmul.mubr.bf16.gmra.mxu0 %v473
          %v528 = vpop.f32.mrf.mxu0
          %v529 = vadd.f32 0.0, %v528
          %v530 = vpop.f32.mrf.mxu0
          %v531 = vpop.f32.mrf.mxu0
          %v532 = vadd.f32 0.0, %v531
          %v533 = vpop.f32.mrf.mxu0
          %534 = vmatprep.mubr.bf16.mxu0 0
          %535 = vmatmul.mubr.bf16.gmra.mxu0 %v476
          %v536 = vpop.f32.mrf.mxu0
          %v537 = vadd.f32 0.0, %v536
          %v538 = vpop.f32.mrf.mxu0
          %v539 = vpop.f32.mrf.mxu0
          %v540 = vadd.f32 0.0, %v539
          %v541 = vpop.f32.mrf.mxu0
          %542 = vdwg.mxu0
          %v543 = vld [vmem:[#allocation8] sm:$0xf]
          %v544 = vld [vmem:[#allocation8 + $0x4] sm:$0xf]
          %v545 = vld [vmem:[#allocation8 + $0x8] sm:$0xf]
          %v546 = vld [vmem:[#allocation8 + $0xc] sm:$0xf]
          %v547 = vld [vmem:[#allocation8 + $0x10] sm:$0xf]
          %v548 = vld [vmem:[#allocation8 + $0x14] sm:$0xf]
          %v549 = vld [vmem:[#allocation8 + $0x18] sm:$0xf]
          %v550 = vld [vmem:[#allocation8 + $0x1c] sm:$0xf]
          %v551 = vld [vmem:[#allocation8 + $0x20] sm:$0xf]
          %v552 = vld [vmem:[#allocation8 + $0x24] sm:$0xf]
          %v553 = vld [vmem:[#allocation8 + $0x28] sm:$0xf]
          %v554 = vld [vmem:[#allocation8 + $0x2c] sm:$0xf]
          %v555 = vld [vmem:[#allocation8 + $0x30] sm:$0xf]
          %v556 = vld [vmem:[#allocation8 + $0x34] sm:$0xf]
          %v557 = vld [vmem:[#allocation8 + $0x38] sm:$0xf]
          %v558 = vld [vmem:[#allocation8 + $0x3c] sm:$0xf]
          %v559 = vpack.c.bf16 %v516, %v513
          %v560 = vpack.c.bf16 %v524, %v521
          %v561 = vpack.c.bf16 %v532, %v529
          %v562 = vpack.c.bf16 %v540, %v537
          %v563 = vld [vmem:[#allocation9] sm:$0xf]
          %v564 = vld [vmem:[#allocation9 + $0x4] sm:$0xf]
          %v565 = vld [vmem:[#allocation9 + $0x8] sm:$0xf]
          %v566 = vld [vmem:[#allocation9 + $0xc] sm:$0xf]
          %v567 = vld [vmem:[#allocation9 + $0x10] sm:$0xf]
          %v568 = vld [vmem:[#allocation9 + $0x14] sm:$0xf]
          %v569 = vld [vmem:[#allocation9 + $0x18] sm:$0xf]
          %v570 = vld [vmem:[#allocation9 + $0x1c] sm:$0xf]
          %v571 = vld [vmem:[#allocation9 + $0x20] sm:$0xf]
          %v572 = vld [vmem:[#allocation9 + $0x24] sm:$0xf]
          %v573 = vld [vmem:[#allocation9 + $0x28] sm:$0xf]
          %v574 = vld [vmem:[#allocation9 + $0x2c] sm:$0xf]
          %v575 = vld [vmem:[#allocation9 + $0x30] sm:$0xf]
          %v576 = vld [vmem:[#allocation9 + $0x34] sm:$0xf]
          %v577 = vld [vmem:[#allocation9 + $0x38] sm:$0xf]
          %v578 = vld [vmem:[#allocation9 + $0x3c] sm:$0xf]
          %v595 = vunpack.c.l.b16 %v563
          %v596 = vunpack.c.l.b16 %v564
          %v597 = vunpack.c.l.b16 %v565
          %v598 = vunpack.c.l.b16 %v566
          %v599 = vunpack.c.l.b16 %v567
          %v600 = vunpack.c.l.b16 %v568
          %v601 = vunpack.c.l.b16 %v569
          %v602 = vunpack.c.l.b16 %v570
          %v603 = vunpack.c.l.b16 %v571
          %v604 = vunpack.c.l.b16 %v572
          %v605 = vunpack.c.l.b16 %v573
          %v606 = vunpack.c.l.b16 %v574
          %v607 = vunpack.c.l.b16 %v575
          %v608 = vunpack.c.l.b16 %v576
          %v609 = vunpack.c.l.b16 %v577
          %v610 = vunpack.c.l.b16 %v578
          %v611 = vpack.c.b16 %v596, %v595
          %v612 = vpack.c.b16 %v598, %v597
          %v613 = vpack.c.b16 %v600, %v599
          %v614 = vpack.c.b16 %v602, %v601
          %v615 = vpack.c.b16 %v604, %v603
          %v616 = vpack.c.b16 %v606, %v605
          %v617 = vpack.c.b16 %v608, %v607
          %v618 = vpack.c.b16 %v610, %v609
          %627 = vmatprep.subr.bf16.mxu0 0
          %628 = vmatpush1.bf16.msra.mxu0 %v618
          %629 = vmatprep.subr.bf16.mxu0 0
          %630 = vmatpush1.bf16.msra.mxu0 %v617
          %631 = vmatprep.subr.bf16.mxu0 0
          %632 = vmatpush1.bf16.msra.mxu0 %v616
          %633 = vmatprep.subr.bf16.mxu0 0
          %634 = vmatpush1.bf16.msra.mxu0 %v615
          %635 = vmatprep.subr.bf16.mxu0 0
          %636 = vmatpush1.bf16.msra.mxu0 %v614
          %637 = vmatprep.subr.bf16.mxu0 0
          %638 = vmatpush1.bf16.msra.mxu0 %v613
          %639 = vmatprep.subr.bf16.mxu0 0
          %640 = vmatpush1.bf16.msra.mxu0 %v612
          %641 = vmatprep.subr.bf16.mxu0 0
          %642 = vmatpush1.bf16.msra.mxu0 %v611
          %643 = vmatprep.subr.bf16.mxu0 0
          %644 = vmatpush2.bf16.msra.mxu0 0
          %645 = vmatprep.subr.bf16.mxu0 0
          %646 = vmatpush2.bf16.msra.mxu0 0
          %647 = vmatprep.subr.bf16.mxu0 0
          %648 = vmatpush2.bf16.msra.mxu0 0
          %649 = vmatprep.subr.bf16.mxu0 0
          %650 = vmatpush2.bf16.msra.mxu0 0
          %651 = vmatprep.subr.bf16.mxu0 0
          %652 = vmatpush2.bf16.msra.mxu0 0
          %653 = vmatprep.subr.bf16.mxu0 0
          %654 = vmatpush2.bf16.msra.mxu0 0
          %655 = vmatprep.subr.bf16.mxu0 0
          %656 = vmatpush2.bf16.msra.mxu0 0
          %657 = vmatprep.subr.bf16.mxu0 0
          %658 = vmatpush2.bf16.msra.mxu0 0
          %659 = vmatprep.mubr.bf16.mxu0 0
          %660 = vmatmul.mubr.bf16.gmra.mxu0 %v559
          %v661 = vpop.f32.mrf.mxu0
          %v662 = vadd.f32 0.0, %v661
          %v663 = vpop.f32.mrf.mxu0
          %v664 = vpop.f32.mrf.mxu0
          %v665 = vadd.f32 0.0, %v664
          %v666 = vpop.f32.mrf.mxu0
          %667 = vmatprep.mubr.bf16.mxu0 0
          %668 = vmatmul.mubr.bf16.gmra.mxu0 %v560
          %v669 = vpop.f32.mrf.mxu0
          %v670 = vadd.f32 0.0, %v669
          %v671 = vpop.f32.mrf.mxu0
          %v672 = vpop.f32.mrf.mxu0
          %v673 = vadd.f32 0.0, %v672
          %v674 = vpop.f32.mrf.mxu0
          %675 = vmatprep.mubr.bf16.mxu0 0
          %676 = vmatmul.mubr.bf16.gmra.mxu0 %v561
          %v677 = vpop.f32.mrf.mxu0
          %v678 = vadd.f32 0.0, %v677
          %v679 = vpop.f32.mrf.mxu0
          %v680 = vpop.f32.mrf.mxu0
          %v681 = vadd.f32 0.0, %v680
          %v682 = vpop.f32.mrf.mxu0
          %683 = vmatprep.mubr.bf16.mxu0 0
          %684 = vmatmul.mubr.bf16.gmra.mxu0 %v562
          %v685 = vpop.f32.mrf.mxu0
          %v686 = vadd.f32 0.0, %v685
          %v687 = vpop.f32.mrf.mxu0
          %v688 = vpop.f32.mrf.mxu0
          %v689 = vadd.f32 0.0, %v688
          %v690 = vpop.f32.mrf.mxu0
          %691 = vdwg.mxu0
          %v700 = vunpack.c.l.b16 %v405
          %v701 = vunpack.c.l.b16 %v406
          %v702 = vunpack.c.l.b16 %v407
          %v703 = vunpack.c.l.b16 %v408
          %v704 = vunpack.c.l.b16 %v409
          %v705 = vunpack.c.l.b16 %v410
          %v706 = vunpack.c.l.b16 %v411
          %v707 = vunpack.c.l.b16 %v412
          %v708 = vpack.c.b16 %v701, %v700
          %v709 = vpack.c.b16 %v703, %v702
          %v710 = vpack.c.b16 %v705, %v704
          %v711 = vpack.c.b16 %v707, %v706
          %v732 = vunpack.c.l.b16 %v543
          %v733 = vunpack.c.l.b16 %v544
          %v734 = vunpack.c.l.b16 %v545
          %v735 = vunpack.c.l.b16 %v546
          %v736 = vunpack.c.l.b16 %v547
          %v737 = vunpack.c.l.b16 %v548
          %v738 = vunpack.c.l.b16 %v549
          %v739 = vunpack.c.l.b16 %v550
          %v740 = vunpack.c.l.b16 %v551
          %v741 = vunpack.c.l.b16 %v552
          %v742 = vunpack.c.l.b16 %v553
          %v743 = vunpack.c.l.b16 %v554
          %v744 = vunpack.c.l.b16 %v555
          %v745 = vunpack.c.l.b16 %v556
          %v746 = vunpack.c.l.b16 %v557
          %v747 = vunpack.c.l.b16 %v558
          %v748 = vpack.c.b16 %v733, %v732
          %v749 = vpack.c.b16 %v735, %v734
          %v750 = vpack.c.b16 %v737, %v736
          %v751 = vpack.c.b16 %v739, %v738
          %v752 = vpack.c.b16 %v741, %v740
          %v753 = vpack.c.b16 %v743, %v742
          %v754 = vpack.c.b16 %v745, %v744
          %v755 = vpack.c.b16 %v747, %v746
          %764 = vmatprep.subr.bf16.mxu0 0
          %765 = vmatpush1.bf16.msra.mxu0 %v755
          %766 = vmatprep.subr.bf16.mxu0 0
          %767 = vmatpush1.bf16.msra.mxu0 %v754
          %768 = vmatprep.subr.bf16.mxu0 0
          %769 = vmatpush1.bf16.msra.mxu0 %v753
          %770 = vmatprep.subr.bf16.mxu0 0
          %771 = vmatpush1.bf16.msra.mxu0 %v752
          %772 = vmatprep.subr.bf16.mxu0 0
          %773 = vmatpush1.bf16.msra.mxu0 %v751
          %774 = vmatprep.subr.bf16.mxu0 0
          %775 = vmatpush1.bf16.msra.mxu0 %v750
          %776 = vmatprep.subr.bf16.mxu0 0
          %777 = vmatpush1.bf16.msra.mxu0 %v749
          %778 = vmatprep.subr.bf16.mxu0 0
          %779 = vmatpush1.bf16.msra.mxu0 %v748
          %780 = vmatprep.subr.bf16.mxu0 0
          %781 = vmatpush2.bf16.msra.mxu0 0
          %782 = vmatprep.subr.bf16.mxu0 0
          %783 = vmatpush2.bf16.msra.mxu0 0
          %784 = vmatprep.subr.bf16.mxu0 0
          %785 = vmatpush2.bf16.msra.mxu0 0
          %786 = vmatprep.subr.bf16.mxu0 0
          %787 = vmatpush2.bf16.msra.mxu0 0
          %788 = vmatprep.subr.bf16.mxu0 0
          %789 = vmatpush2.bf16.msra.mxu0 0
          %790 = vmatprep.subr.bf16.mxu0 0
          %791 = vmatpush2.bf16.msra.mxu0 0
          %792 = vmatprep.subr.bf16.mxu0 0
          %793 = vmatpush2.bf16.msra.mxu0 0
          %794 = vmatprep.subr.bf16.mxu0 0
          %795 = vmatpush2.bf16.msra.mxu0 0
          %796 = vmatprep.mubr.bf16.mxu0 0
          %797 = vmatmul.mubr.bf16.gmra.mxu0 %v708
          %v798 = vpop.f32.mrf.mxu0
          %v799 = vadd.f32 %v662, %v798
          %v800 = vpop.f32.mrf.mxu0
          %v801 = vpop.f32.mrf.mxu0
          %v802 = vadd.f32 %v665, %v801
          %v803 = vpop.f32.mrf.mxu0
          %804 = vmatprep.mubr.bf16.mxu0 0
          %805 = vmatmul.mubr.bf16.gmra.mxu0 %v709
          %v806 = vpop.f32.mrf.mxu0
          %v807 = vadd.f32 %v670, %v806
          %v808 = vpop.f32.mrf.mxu0
          %v809 = vpop.f32.mrf.mxu0
          %v810 = vadd.f32 %v673, %v809
          %v811 = vpop.f32.mrf.mxu0
          %812 = vmatprep.mubr.bf16.mxu0 0
          %813 = vmatmul.mubr.bf16.gmra.mxu0 %v710
          %v814 = vpop.f32.mrf.mxu0
          %v815 = vadd.f32 %v678, %v814
          %v816 = vpop.f32.mrf.mxu0
          %v817 = vpop.f32.mrf.mxu0
          %v818 = vadd.f32 %v681, %v817
          %v819 = vpop.f32.mrf.mxu0
          %820 = vmatprep.mubr.bf16.mxu0 0
          %821 = vmatmul.mubr.bf16.gmra.mxu0 %v711
          %v822 = vpop.f32.mrf.mxu0
          %v823 = vadd.f32 %v686, %v822
          %v824 = vpop.f32.mrf.mxu0
          %v825 = vpop.f32.mrf.mxu0
          %v826 = vadd.f32 %v689, %v825
          %v827 = vpop.f32.mrf.mxu0
          %828 = vdwg.mxu0
          %v829 = vld [vmem:[%s4] sm:$0x1]
          %v831 = vlaneseq
          %v832 = vshrl.u32 %v831, 7
          %v833 = vsub.s32 0, %v832
          %v834 = vrot.slane %v829, %v833
          %v836 = vadd.f32 %v799, %v834
          %v837 = vadd.f32 %v802, %v834
          %v838 = vadd.f32 %v807, %v834
          %v839 = vadd.f32 %v810, %v834
          %v840 = vadd.f32 %v815, %v834
          %v841 = vadd.f32 %v818, %v834
          %v842 = vadd.f32 %v823, %v834
          %v843 = vadd.f32 %v826, %v834
          %v844 = vmax.f32 %v836, 0.0
          %v845 = vmax.f32 %v837, 0.0
          %v846 = vmax.f32 %v838, 0.0
          %v847 = vmax.f32 %v839, 0.0
          %v848 = vmax.f32 %v840, 0.0
          %v849 = vmax.f32 %v841, 0.0
          %v850 = vmax.f32 %v842, 0.0
          %v851 = vmax.f32 %v843, 0.0
          %v852 = vpack.c.bf16 %v845, %v844
          %v853 = vpack.c.bf16 %v847, %v846
          %v854 = vpack.c.bf16 %v849, %v848
          %v855 = vpack.c.bf16 %v851, %v850
          %v860 = vunpack.c.l.b16 %v852
          %v861 = vunpack.c.h.b16 %v852
          %v862 = vunpack.c.l.b16 %v853
          %v863 = vunpack.c.h.b16 %v853
          %v864 = vunpack.c.l.b16 %v854
          %v865 = vunpack.c.h.b16 %v854
          %v866 = vunpack.c.l.b16 %v855
          %v867 = vunpack.c.h.b16 %v855
          %v868 = vpack.c.b16 %v860, %v860
          %v869 = vpack.c.b16 %v861, %v861
          %v870 = vpack.c.b16 %v862, %v862
          %v871 = vpack.c.b16 %v863, %v863
          %v872 = vpack.c.b16 %v864, %v864
          %v873 = vpack.c.b16 %v865, %v865
          %v874 = vpack.c.b16 %v866, %v866
          %v875 = vpack.c.b16 %v867, %v867
          %s884 = smul.addr %s401, 4
          %s885 = scalar_lea.vmem [#allocation2], %s884
          %886 = vst [vmem:[%s885] sm:$0xf] %v868
          %887 = vst [vmem:[%s885 + $0x4] sm:$0xf] %v869
          %888 = vst [vmem:[%s885 + $0x8] sm:$0xf] %v870
          %889 = vst [vmem:[%s885 + $0xc] sm:$0xf] %v871
          %890 = vst [vmem:[%s885 + $0x10] sm:$0xf] %v872
          %891 = vst [vmem:[%s885 + $0x14] sm:$0xf] %v873
          %892 = vst [vmem:[%s885 + $0x18] sm:$0xf] %v874
          %893 = vst [vmem:[%s885 + $0x1c] sm:$0xf] %v875
          %894 = vst [vmem:[#allocation14] sm:$0xff] 0.0
          %895 = vst [vmem:[#allocation14 + $0x8] sm:$0xff] 0.0
          %896 = vst [vmem:[#allocation14 + $0x10] sm:$0xff] 0.0
          %897 = vst [vmem:[#allocation14 + $0x18] sm:$0xff] 0.0
          %898 = vst [vmem:[#allocation14 + $0x20] sm:$0xff] 0.0
          %899 = vst [vmem:[#allocation14 + $0x28] sm:$0xff] 0.0
          %900 = vst [vmem:[#allocation14 + $0x30] sm:$0xff] 0.0
          %901 = vst [vmem:[#allocation14 + $0x38] sm:$0xff] 0.0
        $region80: #{tpu_custom_call.1} parent=51 // pred_fallthru
          _
        %p902 = scmp.eq.s32.totalorder %s28, 1
        // Predicated region
        $region81: #{tpu_custom_call.1} parent=51 // pred_check
          %p903 = pneg %p902
        $region82: #{tpu_custom_call.1} parent=51 // pred_check_branch
          %905 = sbr.rel (%p903) target = $region84
        $region83: #{tpu_custom_call.1} parent=51 // pred_region
          %s906 = sshra.s32 %s388, 3
          %s907 = sand.u32 %s388, 7
          %s908 = smul.addr %s906, 4
          %s909 = scalar_lea.vmem [#allocation2], %s908
          %v910 = vld [vmem:[%s909] sm:$0xf]
          %v911 = vld [vmem:[%s909 + $0x4] sm:$0xf]
          %v912 = vld [vmem:[%s909 + $0x8] sm:$0xf]
          %v913 = vld [vmem:[%s909 + $0xc] sm:$0xf]
          %v914 = vld [vmem:[%s909 + $0x10] sm:$0xf]
          %v915 = vld [vmem:[%s909 + $0x14] sm:$0xf]
          %v916 = vld [vmem:[%s909 + $0x18] sm:$0xf]
          %v917 = vld [vmem:[%s909 + $0x1c] sm:$0xf]
          %v918 = vld [vmem:[#allocation2] sm:$0xf]
          %v919 = vld [vmem:[#allocation2 + $0x4] sm:$0xf]
          %v920 = vld [vmem:[#allocation2 + $0x8] sm:$0xf]
          %v921 = vld [vmem:[#allocation2 + $0xc] sm:$0xf]
          %v922 = vld [vmem:[#allocation2 + $0x10] sm:$0xf]
          %v923 = vld [vmem:[#allocation2 + $0x14] sm:$0xf]
          %v924 = vld [vmem:[#allocation2 + $0x18] sm:$0xf]
          %v925 = vld [vmem:[#allocation2 + $0x1c] sm:$0xf]
          %v934 = vunpack.c.l.b16 %v389
          %v935 = vunpack.c.l.b16 %v390
          %v936 = vunpack.c.l.b16 %v391
          %v937 = vunpack.c.l.b16 %v392
          %v938 = vunpack.c.l.b16 %v393
          %v939 = vunpack.c.l.b16 %v394
          %v940 = vunpack.c.l.b16 %v395
          %v941 = vunpack.c.l.b16 %v396
          %v942 = vpack.c.b16 %v935, %v934
          %v943 = vpack.c.b16 %v937, %v936
          %v944 = vpack.c.b16 %v939, %v938
          %v945 = vpack.c.b16 %v941, %v940
          %v954 = vunpack.c.l.b16 %v918
          %v955 = vunpack.c.l.b16 %v919
          %v956 = vunpack.c.l.b16 %v920
          %v957 = vunpack.c.l.b16 %v921
          %v958 = vunpack.c.l.b16 %v922
          %v959 = vunpack.c.l.b16 %v923
          %v960 = vunpack.c.l.b16 %v924
          %v961 = vunpack.c.l.b16 %v925
          %v962 = vpack.c.b16 %v955, %v954
          %v963 = vpack.c.b16 %v957, %v956
          %v964 = vpack.c.b16 %v959, %v958
          %v965 = vpack.c.b16 %v961, %v960
          %vm970 = vcmask 523264
          %v972 = vsel %vm970, %v942, 0
          %v975 = vsel %vm970, %v943, 0
          %v978 = vsel %vm970, %v944, 0
          %v981 = vsel %vm970, %v945, 0
          %983 = vmatprep.subr.bf16.mxu0 0
          %984 = vmatpush1.bf16.msra.mxu0 0
          %985 = vmatprep.subr.bf16.mxu0 0
          %986 = vmatpush1.bf16.msra.mxu0 0
          %987 = vmatprep.subr.bf16.mxu0 0
          %988 = vmatpush1.bf16.msra.mxu0 0
          %989 = vmatprep.subr.bf16.mxu0 0
          %990 = vmatpush1.bf16.msra.mxu0 0
          %991 = vmatprep.subr.bf16.mxu0 0
          %992 = vmatpush1.bf16.msra.mxu0 %v965
          %993 = vmatprep.subr.bf16.mxu0 0
          %994 = vmatpush1.bf16.msra.mxu0 %v964
          %995 = vmatprep.subr.bf16.mxu0 0
          %996 = vmatpush1.bf16.msra.mxu0 %v963
          %997 = vmatprep.subr.bf16.mxu0 0
          %998 = vmatpush1.bf16.msra.mxu0 %v962
          %999 = vmatprep.subr.bf16.mxu0 0
          %1000 = vmatpush2.bf16.msra.mxu0 0
          %1001 = vmatprep.subr.bf16.mxu0 0
          %1002 = vmatpush2.bf16.msra.mxu0 0
          %1003 = vmatprep.subr.bf16.mxu0 0
          %1004 = vmatpush2.bf16.msra.mxu0 0
          %1005 = vmatprep.subr.bf16.mxu0 0
          %1006 = vmatpush2.bf16.msra.mxu0 0
          %1007 = vmatprep.subr.bf16.mxu0 0
          %1008 = vmatpush2.bf16.msra.mxu0 0
          %1009 = vmatprep.subr.bf16.mxu0 0
          %1010 = vmatpush2.bf16.msra.mxu0 0
          %1011 = vmatprep.subr.bf16.mxu0 0
          %1012 = vmatpush2.bf16.msra.mxu0 0
          %1013 = vmatprep.subr.bf16.mxu0 0
          %1014 = vmatpush2.bf16.msra.mxu0 0
          %1015 = vmatprep.mubr.bf16.mxu0 0
          %1016 = vmatmul.mubr.bf16.gmra.mxu0 %v972
          %v1017 = vpop.f32.mrf.mxu0
          %v1018 = vadd.f32 0.0, %v1017
          %v1019 = vpop.f32.mrf.mxu0
          %v1020 = vpop.f32.mrf.mxu0
          %v1021 = vadd.f32 0.0, %v1020
          %v1022 = vpop.f32.mrf.mxu0
          %1023 = vmatprep.mubr.bf16.mxu0 0
          %1024 = vmatmul.mubr.bf16.gmra.mxu0 %v975
          %v1025 = vpop.f32.mrf.mxu0
          %v1026 = vadd.f32 0.0, %v1025
          %v1027 = vpop.f32.mrf.mxu0
          %v1028 = vpop.f32.mrf.mxu0
          %v1029 = vadd.f32 0.0, %v1028
          %v1030 = vpop.f32.mrf.mxu0
          %1031 = vmatprep.mubr.bf16.mxu0 0
          %1032 = vmatmul.mubr.bf16.gmra.mxu0 %v978
          %v1033 = vpop.f32.mrf.mxu0
          %v1034 = vadd.f32 0.0, %v1033
          %v1035 = vpop.f32.mrf.mxu0
          %v1036 = vpop.f32.mrf.mxu0
          %v1037 = vadd.f32 0.0, %v1036
          %v1038 = vpop.f32.mrf.mxu0
          %1039 = vmatprep.mubr.bf16.mxu0 0
          %1040 = vmatmul.mubr.bf16.gmra.mxu0 %v981
          %v1041 = vpop.f32.mrf.mxu0
          %v1042 = vadd.f32 0.0, %v1041
          %v1043 = vpop.f32.mrf.mxu0
          %v1044 = vpop.f32.mrf.mxu0
          %v1045 = vadd.f32 0.0, %v1044
          %v1046 = vpop.f32.mrf.mxu0
          %1047 = vdwg.mxu0
          %v1048 = vld [vmem:[#allocation11] sm:$0xf]
          %v1049 = vld [vmem:[#allocation11 + $0x4] sm:$0xf]
          %v1050 = vld [vmem:[#allocation11 + $0x8] sm:$0xf]
          %v1051 = vld [vmem:[#allocation11 + $0xc] sm:$0xf]
          %v1052 = vld [vmem:[#allocation11 + $0x10] sm:$0xf]
          %v1053 = vld [vmem:[#allocation11 + $0x14] sm:$0xf]
          %v1054 = vld [vmem:[#allocation11 + $0x18] sm:$0xf]
          %v1055 = vld [vmem:[#allocation11 + $0x1c] sm:$0xf]
          %v1056 = vld [vmem:[#allocation11 + $0x20] sm:$0xf]
          %v1057 = vld [vmem:[#allocation11 + $0x24] sm:$0xf]
          %v1058 = vld [vmem:[#allocation11 + $0x28] sm:$0xf]
          %v1059 = vld [vmem:[#allocation11 + $0x2c] sm:$0xf]
          %v1060 = vld [vmem:[#allocation11 + $0x30] sm:$0xf]
          %v1061 = vld [vmem:[#allocation11 + $0x34] sm:$0xf]
          %v1062 = vld [vmem:[#allocation11 + $0x38] sm:$0xf]
          %v1063 = vld [vmem:[#allocation11 + $0x3c] sm:$0xf]
          %v1064 = vpack.c.bf16 %v1021, %v1018
          %v1065 = vpack.c.bf16 %v1029, %v1026
          %v1066 = vpack.c.bf16 %v1037, %v1034
          %v1067 = vpack.c.bf16 %v1045, %v1042
          %v1068 = vld [vmem:[#allocation12] sm:$0xf]
          %v1069 = vld [vmem:[#allocation12 + $0x4] sm:$0xf]
          %v1070 = vld [vmem:[#allocation12 + $0x8] sm:$0xf]
          %v1071 = vld [vmem:[#allocation12 + $0xc] sm:$0xf]
          %v1072 = vld [vmem:[#allocation12 + $0x10] sm:$0xf]
          %v1073 = vld [vmem:[#allocation12 + $0x14] sm:$0xf]
          %v1074 = vld [vmem:[#allocation12 + $0x18] sm:$0xf]
          %v1075 = vld [vmem:[#allocation12 + $0x1c] sm:$0xf]
          %v1076 = vld [vmem:[#allocation12 + $0x20] sm:$0xf]
          %v1077 = vld [vmem:[#allocation12 + $0x24] sm:$0xf]
          %v1078 = vld [vmem:[#allocation12 + $0x28] sm:$0xf]
          %v1079 = vld [vmem:[#allocation12 + $0x2c] sm:$0xf]
          %v1080 = vld [vmem:[#allocation12 + $0x30] sm:$0xf]
          %v1081 = vld [vmem:[#allocation12 + $0x34] sm:$0xf]
          %v1082 = vld [vmem:[#allocation12 + $0x38] sm:$0xf]
          %v1083 = vld [vmem:[#allocation12 + $0x3c] sm:$0xf]
          %v1100 = vunpack.c.l.b16 %v1068
          %v1101 = vunpack.c.l.b16 %v1069
          %v1102 = vunpack.c.l.b16 %v1070
          %v1103 = vunpack.c.l.b16 %v1071
          %v1104 = vunpack.c.l.b16 %v1072
          %v1105 = vunpack.c.l.b16 %v1073
          %v1106 = vunpack.c.l.b16 %v1074
          %v1107 = vunpack.c.l.b16 %v1075
          %v1108 = vunpack.c.l.b16 %v1076
          %v1109 = vunpack.c.l.b16 %v1077
          %v1110 = vunpack.c.l.b16 %v1078
          %v1111 = vunpack.c.l.b16 %v1079
          %v1112 = vunpack.c.l.b16 %v1080
          %v1113 = vunpack.c.l.b16 %v1081
          %v1114 = vunpack.c.l.b16 %v1082
          %v1115 = vunpack.c.l.b16 %v1083
          %v1116 = vpack.c.b16 %v1101, %v1100
          %v1117 = vpack.c.b16 %v1103, %v1102
          %v1118 = vpack.c.b16 %v1105, %v1104
          %v1119 = vpack.c.b16 %v1107, %v1106
          %v1120 = vpack.c.b16 %v1109, %v1108
          %v1121 = vpack.c.b16 %v1111, %v1110
          %v1122 = vpack.c.b16 %v1113, %v1112
          %v1123 = vpack.c.b16 %v1115, %v1114
          %1132 = vmatprep.subr.bf16.mxu0 0
          %1133 = vmatpush1.bf16.msra.mxu0 %v1123
          %1134 = vmatprep.subr.bf16.mxu0 0
          %1135 = vmatpush1.bf16.msra.mxu0 %v1122
          %1136 = vmatprep.subr.bf16.mxu0 0
          %1137 = vmatpush1.bf16.msra.mxu0 %v1121
          %1138 = vmatprep.subr.bf16.mxu0 0
          %1139 = vmatpush1.bf16.msra.mxu0 %v1120
          %1140 = vmatprep.subr.bf16.mxu0 0
          %1141 = vmatpush1.bf16.msra.mxu0 %v1119
          %1142 = vmatprep.subr.bf16.mxu0 0
          %1143 = vmatpush1.bf16.msra.mxu0 %v1118
          %1144 = vmatprep.subr.bf16.mxu0 0
          %1145 = vmatpush1.bf16.msra.mxu0 %v1117
          %1146 = vmatprep.subr.bf16.mxu0 0
          %1147 = vmatpush1.bf16.msra.mxu0 %v1116
          %1148 = vmatprep.subr.bf16.mxu0 0
          %1149 = vmatpush2.bf16.msra.mxu0 0
          %1150 = vmatprep.subr.bf16.mxu0 0
          %1151 = vmatpush2.bf16.msra.mxu0 0
          %1152 = vmatprep.subr.bf16.mxu0 0
          %1153 = vmatpush2.bf16.msra.mxu0 0
          %1154 = vmatprep.subr.bf16.mxu0 0
          %1155 = vmatpush2.bf16.msra.mxu0 0
          %1156 = vmatprep.subr.bf16.mxu0 0
          %1157 = vmatpush2.bf16.msra.mxu0 0
          %1158 = vmatprep.subr.bf16.mxu0 0
          %1159 = vmatpush2.bf16.msra.mxu0 0
          %1160 = vmatprep.subr.bf16.mxu0 0
          %1161 = vmatpush2.bf16.msra.mxu0 0
          %1162 = vmatprep.subr.bf16.mxu0 0
          %1163 = vmatpush2.bf16.msra.mxu0 0
          %1164 = vmatprep.mubr.bf16.mxu0 0
          %1165 = vmatmul.mubr.bf16.gmra.mxu0 %v1064
          %v1166 = vpop.f32.mrf.mxu0
          %v1167 = vadd.f32 0.0, %v1166
          %v1168 = vpop.f32.mrf.mxu0
          %v1169 = vpop.f32.mrf.mxu0
          %v1170 = vadd.f32 0.0, %v1169
          %v1171 = vpop.f32.mrf.mxu0
          %1172 = vmatprep.mubr.bf16.mxu0 0
          %1173 = vmatmul.mubr.bf16.gmra.mxu0 %v1065
          %v1174 = vpop.f32.mrf.mxu0
          %v1175 = vadd.f32 0.0, %v1174
          %v1176 = vpop.f32.mrf.mxu0
          %v1177 = vpop.f32.mrf.mxu0
          %v1178 = vadd.f32 0.0, %v1177
          %v1179 = vpop.f32.mrf.mxu0
          %1180 = vmatprep.mubr.bf16.mxu0 0
          %1181 = vmatmul.mubr.bf16.gmra.mxu0 %v1066
          %v1182 = vpop.f32.mrf.mxu0
          %v1183 = vadd.f32 0.0, %v1182
          %v1184 = vpop.f32.mrf.mxu0
          %v1185 = vpop.f32.mrf.mxu0
          %v1186 = vadd.f32 0.0, %v1185
          %v1187 = vpop.f32.mrf.mxu0
          %1188 = vmatprep.mubr.bf16.mxu0 0
          %1189 = vmatmul.mubr.bf16.gmra.mxu0 %v1067
          %v1190 = vpop.f32.mrf.mxu0
          %v1191 = vadd.f32 0.0, %v1190
          %v1192 = vpop.f32.mrf.mxu0
          %v1193 = vpop.f32.mrf.mxu0
          %v1194 = vadd.f32 0.0, %v1193
          %v1195 = vpop.f32.mrf.mxu0
          %1196 = vdwg.mxu0
          %v1205 = vunpack.c.l.b16 %v910
          %v1206 = vunpack.c.l.b16 %v911
          %v1207 = vunpack.c.l.b16 %v912
          %v1208 = vunpack.c.l.b16 %v913
          %v1209 = vunpack.c.l.b16 %v914
          %v1210 = vunpack.c.l.b16 %v915
          %v1211 = vunpack.c.l.b16 %v916
          %v1212 = vunpack.c.l.b16 %v917
          %v1213 = vpack.c.b16 %v1206, %v1205
          %v1214 = vpack.c.b16 %v1208, %v1207
          %v1215 = vpack.c.b16 %v1210, %v1209
          %v1216 = vpack.c.b16 %v1212, %v1211
          %v1237 = vunpack.c.l.b16 %v1048
          %v1238 = vunpack.c.l.b16 %v1049
          %v1239 = vunpack.c.l.b16 %v1050
          %v1240 = vunpack.c.l.b16 %v1051
          %v1241 = vunpack.c.l.b16 %v1052
          %v1242 = vunpack.c.l.b16 %v1053
          %v1243 = vunpack.c.l.b16 %v1054
          %v1244 = vunpack.c.l.b16 %v1055
          %v1245 = vunpack.c.l.b16 %v1056
          %v1246 = vunpack.c.l.b16 %v1057
          %v1247 = vunpack.c.l.b16 %v1058
          %v1248 = vunpack.c.l.b16 %v1059
          %v1249 = vunpack.c.l.b16 %v1060
          %v1250 = vunpack.c.l.b16 %v1061
          %v1251 = vunpack.c.l.b16 %v1062
          %v1252 = vunpack.c.l.b16 %v1063
          %v1253 = vpack.c.b16 %v1238, %v1237
          %v1254 = vpack.c.b16 %v1240, %v1239
          %v1255 = vpack.c.b16 %v1242, %v1241
          %v1256 = vpack.c.b16 %v1244, %v1243
          %v1257 = vpack.c.b16 %v1246, %v1245
          %v1258 = vpack.c.b16 %v1248, %v1247
          %v1259 = vpack.c.b16 %v1250, %v1249
          %v1260 = vpack.c.b16 %v1252, %v1251
          %1269 = vmatprep.subr.bf16.mxu0 0
          %1270 = vmatpush1.bf16.msra.mxu0 %v1260
          %1271 = vmatprep.subr.bf16.mxu0 0
          %1272 = vmatpush1.bf16.msra.mxu0 %v1259
          %1273 = vmatprep.subr.bf16.mxu0 0
          %1274 = vmatpush1.bf16.msra.mxu0 %v1258
          %1275 = vmatprep.subr.bf16.mxu0 0
          %1276 = vmatpush1.bf16.msra.mxu0 %v1257
          %1277 = vmatprep.subr.bf16.mxu0 0
          %1278 = vmatpush1.bf16.msra.mxu0 %v1256
          %1279 = vmatprep.subr.bf16.mxu0 0
          %1280 = vmatpush1.bf16.msra.mxu0 %v1255
          %1281 = vmatprep.subr.bf16.mxu0 0
          %1282 = vmatpush1.bf16.msra.mxu0 %v1254
          %1283 = vmatprep.subr.bf16.mxu0 0
          %1284 = vmatpush1.bf16.msra.mxu0 %v1253
          %1285 = vmatprep.subr.bf16.mxu0 0
          %1286 = vmatpush2.bf16.msra.mxu0 0
          %1287 = vmatprep.subr.bf16.mxu0 0
          %1288 = vmatpush2.bf16.msra.mxu0 0
          %1289 = vmatprep.subr.bf16.mxu0 0
          %1290 = vmatpush2.bf16.msra.mxu0 0
          %1291 = vmatprep.subr.bf16.mxu0 0
          %1292 = vmatpush2.bf16.msra.mxu0 0
          %1293 = vmatprep.subr.bf16.mxu0 0
          %1294 = vmatpush2.bf16.msra.mxu0 0
          %1295 = vmatprep.subr.bf16.mxu0 0
          %1296 = vmatpush2.bf16.msra.mxu0 0
          %1297 = vmatprep.subr.bf16.mxu0 0
          %1298 = vmatpush2.bf16.msra.mxu0 0
          %1299 = vmatprep.subr.bf16.mxu0 0
          %1300 = vmatpush2.bf16.msra.mxu0 0
          %1301 = vmatprep.mubr.bf16.mxu0 0
          %1302 = vmatmul.mubr.bf16.gmra.mxu0 %v1213
          %v1303 = vpop.f32.mrf.mxu0
          %v1304 = vadd.f32 %v1167, %v1303
          %v1305 = vpop.f32.mrf.mxu0
          %v1306 = vpop.f32.mrf.mxu0
          %v1307 = vadd.f32 %v1170, %v1306
          %v1308 = vpop.f32.mrf.mxu0
          %1309 = vmatprep.mubr.bf16.mxu0 0
          %1310 = vmatmul.mubr.bf16.gmra.mxu0 %v1214
          %v1311 = vpop.f32.mrf.mxu0
          %v1312 = vadd.f32 %v1175, %v1311
          %v1313 = vpop.f32.mrf.mxu0
          %v1314 = vpop.f32.mrf.mxu0
          %v1315 = vadd.f32 %v1178, %v1314
          %v1316 = vpop.f32.mrf.mxu0
          %1317 = vmatprep.mubr.bf16.mxu0 0
          %1318 = vmatmul.mubr.bf16.gmra.mxu0 %v1215
          %v1319 = vpop.f32.mrf.mxu0
          %v1320 = vadd.f32 %v1183, %v1319
          %v1321 = vpop.f32.mrf.mxu0
          %v1322 = vpop.f32.mrf.mxu0
          %v1323 = vadd.f32 %v1186, %v1322
          %v1324 = vpop.f32.mrf.mxu0
          %1325 = vmatprep.mubr.bf16.mxu0 0
          %1326 = vmatmul.mubr.bf16.gmra.mxu0 %v1216
          %v1327 = vpop.f32.mrf.mxu0
          %v1328 = vadd.f32 %v1191, %v1327
          %v1329 = vpop.f32.mrf.mxu0
          %v1330 = vpop.f32.mrf.mxu0
          %v1331 = vadd.f32 %v1194, %v1330
          %v1332 = vpop.f32.mrf.mxu0
          %1333 = vdwg.mxu0
          %v1334 = vld [vmem:[%s7] sm:$0x1]
          %v1336 = vlaneseq
          %v1337 = vshrl.u32 %v1336, 7
          %v1338 = vsub.s32 0, %v1337
          %v1339 = vrot.slane %v1334, %v1338
          %v1341 = vadd.f32 %v1304, %v1339
          %v1342 = vadd.f32 %v1307, %v1339
          %v1343 = vadd.f32 %v1312, %v1339
          %v1344 = vadd.f32 %v1315, %v1339
          %v1345 = vadd.f32 %v1320, %v1339
          %v1346 = vadd.f32 %v1323, %v1339
          %v1347 = vadd.f32 %v1328, %v1339
          %v1348 = vadd.f32 %v1331, %v1339
          %1349 = vst [vmem:[#allocation14] sm:$0xff] %v1341
          %1350 = vst [vmem:[#allocation14 + $0x8] sm:$0xff] %v1342
          %1351 = vst [vmem:[#allocation14 + $0x10] sm:$0xff] %v1343
          %1352 = vst [vmem:[#allocation14 + $0x18] sm:$0xff] %v1344
          %1353 = vst [vmem:[#allocation14 + $0x20] sm:$0xff] %v1345
          %1354 = vst [vmem:[#allocation14 + $0x28] sm:$0xff] %v1346
          %1355 = vst [vmem:[#allocation14 + $0x30] sm:$0xff] %v1347
          %1356 = vst [vmem:[#allocation14 + $0x38] sm:$0xff] %v1348
        $region84: #{tpu_custom_call.1} parent=51 // pred_fallthru
          _
        // Predicated region
        $region85: #{tpu_custom_call.1} parent=51 // pred_check
          %p1357 = pneg %p227
        $region86: #{tpu_custom_call.1} parent=51 // pred_check_branch
          %1359 = sbr.rel (%p1357) target = $region88
        $region87: #{tpu_custom_call.1} parent=51 // pred_region
          %s1360 = smul.u32 8, %s29
          %s1362 = ssub.s32 1024, 1024
          %1363 = vsyncadd [#allocation5], %s1362
          %s1364 = smul.addr %s1360, 128
          %s1365 = scalar_lea.hbm %s8, %s1364
          %s1366 = sshll.u32 [#allocation14], 4
          %s1367 = int_to_ptr.vmem [resolvable:$true] %s1366
          %1372 = dma.vmem_to_hbm [thread:$0]  %s1367, 1024, %s1365, [#allocation5], 128, 128, 8
        $region88: #{tpu_custom_call.1} parent=51 // pred_fallthru
          _
        // Predicated region
        $region89: #{tpu_custom_call.1} parent=51 // pred_check
          %p1373 = pneg %p227
        $region90: #{tpu_custom_call.1} parent=51 // pred_check_branch
          %1375 = sbr.rel (%p1373) target = $region92
        $region91: #{tpu_custom_call.1} parent=51 // pred_region
          %1376 = dma.done [#allocation5], 1024
        $region92: #{tpu_custom_call.1} parent=51 // pred_fallthru
          _
      $region52: #{tpu_custom_call.1} parent=5 // pred_fallthru
        _
      %p1377 = scmp.le.s32.totalorder 2, %s19
      // Predicated region
      $region93: #{tpu_custom_call.1} parent=5 // pred_check
        %p1378 = pneg %p1377
      $region94: #{tpu_custom_call.1} parent=5 // pred_check_branch
        %1380 = sbr.rel (%p1378) target = $region96
      $region95: #{tpu_custom_call.1} parent=5 // pred_region
        %s1381 = ssub.s32 %s19, 2
      $region96: #{tpu_custom_call.1} parent=5 // pred_fallthru
        _
    $region6: #{tpu_custom_call.1} parent=1 // loop_footer
      %s23 = sadd.s32 1, %s19
    $region7: #{tpu_custom_call.1} parent=1 // loop_footer_branch
      %18 = sbr.rel target = $region3
    $region8: #{tpu_custom_call.1} parent=1 // loop_exit
      _
    %1382 = vsyncpa [#allocation4], 1
    %s1383 = scalar_lea.sflag [#allocation4], 1
    %1384 = vsyncpa %s1383, 1
    %1385 = vsyncpa [#allocation7], 1
    %1386 = vsyncpa [#allocation10], 1
    %1387 = vsyncpa [#allocation13], 1
    %1388 = vsyncpa [#allocation5], 1
    %s1389 = scalar_lea.sflag [#allocation5], 1
    %1390 = vsyncpa %s1389, 1

</llo_original>
